<compile_context>
chip_gen: v7x
topology: tpu7x:2x2x1
jax: 0.10.0
libtpu: 0.0.40
codegen_flags: <defaults>
</compile_context>

<pallas_src>
import math

import jax
import jax.numpy as jnp
from jax import lax
from jax.experimental import pallas as pl
from jax.experimental.pallas import tpu as pltpu


# Target tile sizes (clipped to the padded problem size). VMEM footprint at
# 256/256/512 f32 with double buffering:
#   2*(tm*tk) + 2*(tn*tk) + 2*(tm*tn out) + (tm*tn acc) ~= 2.8 MiB
# -> comfortably inside the scoped-VMEM default on v5e/v6e/v7x.
_TM, _TN, _TK = 256, 256, 512


def _round_up(x, m):
    return ((x + m - 1) // m) * m


def _matmul_kernel_nobias(x_ref, w_ref, o_ref, acc_ref):
    # x_ref: (tm, tk), w_ref: (tn, tk), o_ref: (tm, tn), acc_ref: (tm, tn) f32
    @pl.when(pl.program_id(2) == 0)
    def _():
        acc_ref[...] = jnp.zeros_like(acc_ref)

    # Contract last dims of x and w directly: (tm,tk) x (tn,tk) -> (tm,tn).
    acc_ref[...] += lax.dot_general(
        x_ref[...], w_ref[...],
        dimension_numbers=(((1,), (1,)), ((), ())),
        preferred_element_type=jnp.float32)

    @pl.when(pl.program_id(2) == pl.num_programs(2) - 1)
    def _():
        o_ref[...] = acc_ref[...].astype(o_ref.dtype)


def _matmul_kernel_bias(x_ref, w_ref, b_ref, o_ref, acc_ref):
    # Same as above; bias (1, tn) is applied once in the k==last epilogue.
    @pl.when(pl.program_id(2) == 0)
    def _():
        acc_ref[...] = jnp.zeros_like(acc_ref)

    acc_ref[...] += lax.dot_general(
        x_ref[...], w_ref[...],
        dimension_numbers=(((1,), (1,)), ((), ())),
        preferred_element_type=jnp.float32)

    @pl.when(pl.program_id(2) == pl.num_programs(2) - 1)
    def _():
        o_ref[...] = (acc_ref[...] + b_ref[...].astype(jnp.float32)).astype(o_ref.dtype)


@jax.jit
def feat_linear_trans(x, weight, bias=None):
    """Equivalent of FeatLinearTrans.forward == F.linear(x, weight, bias).

    x: (..., in_d) float32
    weight: (out_d, in_d) float32
    bias: optional (out_d,) float32
    """
    *lead, in_d = x.shape
    out_d, k_w = weight.shape
    assert k_w == in_d, "weight in_d must match x last dim"

    m = 1
    for d in lead:
        m *= d
    x2 = x.reshape(m, in_d)

    # Tile selection: MXU/lane aligned, clipped to the (padded) problem size.
    tm = min(_TM, _round_up(m, 8))
    tn = min(_TN, _round_up(out_d, 128))
    tk = min(_TK, _round_up(in_d, 128))

    m_p = _round_up(m, tm)
    n_p = _round_up(out_d, tn)
    k_p = _round_up(in_d, tk)

    # Zero-pad to tile multiples (padded K columns contribute 0 to the contraction).
    x_p = x2
    if (m_p, k_p) != (m, in_d):
        x_p = jnp.pad(x2, ((0, m_p - m), (0, k_p - in_d)))
    w_p = weight
    if (n_p, k_p) != (out_d, in_d):
        w_p = jnp.pad(weight, ((0, n_p - out_d), (0, k_p - in_d)))

    grid = (m_p // tm, n_p // tn, k_p // tk)

    x_spec = pl.BlockSpec((tm, tk), lambda i, j, k: (i, k))
    w_spec = pl.BlockSpec((tn, tk), lambda i, j, k: (j, k))
    o_spec = pl.BlockSpec((tm, tn), lambda i, j, k: (i, j))
    scratch = [pltpu.VMEM((tm, tn), jnp.float32)]

    cost = pl.CostEstimate(
        flops=2 * m_p * n_p * k_p,
        bytes_accessed=4 * (m_p * k_p + n_p * k_p + m_p * n_p),
        transcendentals=0)

    compiler_params = pltpu.CompilerParams(
        dimension_semantics=("parallel", "parallel", "arbitrary"))

    out_shape = jax.ShapeDtypeStruct((m_p, n_p), x.dtype)

    if bias is None:
        out_p = pl.pallas_call(
            _matmul_kernel_nobias,
            out_shape=out_shape,
            grid_spec=pltpu.PrefetchScalarGridSpec(
                num_scalar_prefetch=0,
                grid=grid,
                in_specs=[x_spec, w_spec],
                out_specs=o_spec,
                scratch_shapes=scratch),
            compiler_params=compiler_params,
            cost_estimate=cost,
        )(x_p, w_p)
    else:
        b2 = bias.reshape(1, out_d)
        b_p = b2 if n_p == out_d else jnp.pad(b2, ((0, 0), (0, n_p - out_d)))
        b_spec = pl.BlockSpec((1, tn), lambda i, j, k: (0, j))
        out_p = pl.pallas_call(
            _matmul_kernel_bias,
            out_shape=out_shape,
            grid_spec=pltpu.PrefetchScalarGridSpec(
                num_scalar_prefetch=0,
                grid=grid,
                in_specs=[x_spec, w_spec, b_spec],
                out_specs=o_spec,
                scratch_shapes=scratch),
            compiler_params=compiler_params,
            cost_estimate=cost,
        )(x_p, w_p, b_p)

    out2 = out_p[:m, :out_d]
    return out2.reshape(*lead, out_d)


def init_feat_linear_trans_params(key, in_d, out_d, bias=False, paraminit="uniform"):
    """Deterministic parameter init mirroring reset_parameters_uniform."""
    if paraminit != "uniform":
        # TODO(synk): only 'uniform' init reproduced; xavier/kaiming paths omitted.
        raise ValueError("only 'uniform' supported in this synthetic script")
    bound = 1.0 / math.sqrt(out_d * in_d)
    kw, kb = jax.random.split(key)
    weight = jax.random.uniform(
        kw, (out_d, in_d), dtype=jnp.float32, minval=-bound, maxval=bound
    )
    b = None
    if bias:
        b = jax.random.uniform(
            kb, (out_d,), dtype=jnp.float32, minval=-bound, maxval=bound
        )
    return weight, b


if __name__ == "__main__":
    key = jax.random.PRNGKey(0)
    k_x, k_p, k_x2, k_p2 = jax.random.split(key, 4)

    # Case 1: matches the original module defaults (bias=False), small shapes.
    batch, seq, in_d, out_d = 2, 8, 32, 32
    x = jax.random.normal(k_x, (batch, seq, in_d), dtype=jnp.float32)
    weight, bias = init_feat_linear_trans_params(k_p, in_d, out_d, bias=False)

    out = jax.block_until_ready(feat_linear_trans(x, weight, bias))
    ref = x @ weight.T
    assert out.shape == (batch, seq, out_d)
    assert jnp.allclose(out, ref, atol=1e-5, rtol=1e-5)

    # Case 2: bias=True, shape exercising multiple N tiles and K accumulation steps.
    batch2, seq2, in_d2, out_d2 = 2, 24, 640, 512
    x2 = jax.random.normal(k_x2, (batch2, seq2, in_d2), dtype=jnp.float32)
    weight2, bias2 = init_feat_linear_trans_params(k_p2, in_d2, out_d2, bias=True)

    out2 = jax.block_until_ready(feat_linear_trans(x2, weight2, bias2))
    ref2 = x2 @ weight2.T + bias2
    assert out2.shape == (batch2, seq2, out_d2)
    assert jnp.allclose(out2, ref2, atol=1e-4, rtol=1e-4)

    print("KERNEL_OK")
</pallas_src>

<mosaic_0001>
module attributes {stable_mosaic.version = 11 : i64} {
  func.func @_matmul_kernel_nobias(%arg0: i32, %arg1: i32, %arg2: i32, %arg3: memref<16x128xf32, #tpu.memory_space<vmem>>, %arg4: memref<128x128xf32, #tpu.memory_space<vmem>>, %arg5: memref<16x128xf32, #tpu.memory_space<vmem>>, %arg6: memref<16x128xf32, #tpu.memory_space<vmem>>) attributes {dimension_semantics = [#tpu.dimension_semantics<parallel>, #tpu.dimension_semantics<parallel>, #tpu.dimension_semantics<arbitrary>], iteration_bounds = array<i64: 1, 1, 1>, scalar_prefetch = 0 : i64, scratch_operands = 1 : i64, tpu.core_type = #tpu.core_type<tc>, window_params = [{transform_indices = @transform_0, window_bounds = array<i64: 16, 128>}, {transform_indices = @transform_1, window_bounds = array<i64: 128, 128>}, {transform_indices = @transform_2, window_bounds = array<i64: 16, 128>}]} {
    %c0_i32 = arith.constant 0 : i32
    %0 = arith.cmpi eq, %arg2, %c0_i32 : i32
    %1 = arith.extui %0 : i1 to i32
    %c0_i32_0 = arith.constant 0 : i32
    %2 = arith.cmpi ne, %1, %c0_i32_0 : i32
    scf.if %2 {
      %cst_10 = arith.constant 0.000000e+00 : f32
      %12 = vector.broadcast %cst_10 : f32 to vector<16x128xf32>
      %c0_11 = arith.constant 0 : index
      %c0_12 = arith.constant 0 : index
      %13 = vector.load %arg6[%c0_11, %c0_12] : memref<16x128xf32, #tpu.memory_space<vmem>>, vector<16x128xf32>
      tpu.vector_store %arg6[%c0_11, %c0_12], %12 {strides = array<i32>} : memref<16x128xf32, #tpu.memory_space<vmem>>, vector<16x128xf32>,
    } else {
    }
    %c0 = arith.constant 0 : index
    %c0_1 = arith.constant 0 : index
    %3 = vector.load %arg6[%c0, %c0_1] : memref<16x128xf32, #tpu.memory_space<vmem>>, vector<16x128xf32>
    %c0_2 = arith.constant 0 : index
    %c0_3 = arith.constant 0 : index
    %4 = vector.load %arg3[%c0_2, %c0_3] : memref<16x128xf32, #tpu.memory_space<vmem>>, vector<16x128xf32>
    %c0_4 = arith.constant 0 : index
    %c0_5 = arith.constant 0 : index
    %5 = vector.load %arg4[%c0_4, %c0_5] : memref<128x128xf32, #tpu.memory_space<vmem>>, vector<128x128xf32>
    %cst = arith.constant dense<0.000000e+00> : vector<16x128xf32>
    %6 = tpu.matmul %4, %5, %cst {dimension_numbers = #tpu.dot_dimension_numbers<[1], [1], [0], [0], [0, 0, 1, 0], [], []>} : vector<16x128xf32>, vector<128x128xf32>, vector<16x128xf32> -> vector<16x128xf32>
    %7 = arith.addf %3, %6 : vector<16x128xf32>
    %c0_6 = arith.constant 0 : index
    %c0_7 = arith.constant 0 : index
    %8 = vector.load %arg6[%c0_6, %c0_7] : memref<16x128xf32, #tpu.memory_space<vmem>>, vector<16x128xf32>
    tpu.vector_store %arg6[%c0_6, %c0_7], %7 {strides = array<i32>} : memref<16x128xf32, #tpu.memory_space<vmem>>, vector<16x128xf32>,
    %c0_i32_8 = arith.constant 0 : i32
    %9 = arith.cmpi eq, %arg2, %c0_i32_8 : i32
    %10 = arith.extui %9 : i1 to i32
    %c0_i32_9 = arith.constant 0 : i32
    %11 = arith.cmpi ne, %10, %c0_i32_9 : i32
    scf.if %11 {
      %c0_10 = arith.constant 0 : index
      %c0_11 = arith.constant 0 : index
      %12 = vector.load %arg6[%c0_10, %c0_11] : memref<16x128xf32, #tpu.memory_space<vmem>>, vector<16x128xf32>
      %c0_12 = arith.constant 0 : index
      %c0_13 = arith.constant 0 : index
      %13 = vector.load %arg5[%c0_12, %c0_13] : memref<16x128xf32, #tpu.memory_space<vmem>>, vector<16x128xf32>
      tpu.vector_store %arg5[%c0_12, %c0_13], %12 {strides = array<i32>} : memref<16x128xf32, #tpu.memory_space<vmem>>, vector<16x128xf32>,
    } else {
    }
    return
  }
  func.func @transform_0(%arg0: i32, %arg1: i32, %arg2: i32) -> (i32, i32) {
    %c0_i32 = arith.constant 0 : i32
    return %arg0, %arg2 : i32, i32
  }
  func.func @transform_1(%arg0: i32, %arg1: i32, %arg2: i32) -> (i32, i32) {
    %c0_i32 = arith.constant 0 : i32
    return %arg1, %arg2 : i32, i32
  }
  func.func @transform_2(%arg0: i32, %arg1: i32, %arg2: i32) -> (i32, i32) {
    %c0_i32 = arith.constant 0 : i32
    return %arg0, %arg1 : i32, i32
  }
}

</mosaic_0001>

<llo_original>
// kernel: feat_linear_trans.1
$region0: #{feat_linear_trans.1}
  #allocation0 [shape = 'u32[]', space=smem, size = 0x4, offset = 0x4, fixed_abs, tag = 'smem constant byte address 0x4 - core index']
  #allocation1 [shape = 'u32[144,128]{1,0:T(1,128)}', space=vmem, size = 0x12000, scoped, tag = 'internal scratch']
  #allocation2 [shape = 'f32[16,128]{1,0:T(8,128)}', space=vmem, size = 0x2000, scoped, tag = 'scratch operand']
  %s0 = inlined_call_operand.vmem [shape: f32[16,128], index: 0, kind: input, shape index: {}]
  %s1 = inlined_call_operand.vmem [shape: f32[128,128], index: 1, kind: input, shape index: {}]
  %s2 = inlined_call_operand.vmem [shape: f32[16,128], index: 2, kind: output, shape index: {}]
  %s3 = sld [smem:[#allocation0]]
  $region26: #{feat_linear_trans.1} parent=0
    _
  %s5 = ssub.s32 1, %s3
  %s6 = scalar_select 0, %s5, %s3
  // Predicated region
  $region2: #{feat_linear_trans.1} parent=0 // pred_check
    _
  $region3: #{feat_linear_trans.1} parent=0 // pred_check_branch
    %8 = sbr.rel (0) target = $region5
  $region4: #{feat_linear_trans.1} parent=0 // pred_region
    _
  $region5: #{feat_linear_trans.1} parent=0 // pred_fallthru
    _
  // Predicated region
  $region6: #{feat_linear_trans.1} parent=0 // pred_check
    _
  $region7: #{feat_linear_trans.1} parent=0 // pred_check_branch
    %10 = sbr.rel (0) target = $region9
  $region8: #{feat_linear_trans.1} parent=0 // pred_region
    _
  $region9: #{feat_linear_trans.1} parent=0 // pred_fallthru
    _
  %p11 = scmp.eq.s32.totalorder 0, 0
  // Predicated region
  $region10: #{feat_linear_trans.1} parent=0 // pred_check
    %p12 = pneg %p11
  $region11: #{feat_linear_trans.1} parent=0 // pred_check_branch
    %14 = sbr.rel (%p12) target = $region13
  $region12: #{feat_linear_trans.1} parent=0 // pred_region
    %15 = vst [vmem:[#allocation2] sm:$0xff] 0.0
    %16 = vst [vmem:[#allocation2 + $0x8] sm:$0xff] 0.0
  $region13: #{feat_linear_trans.1} parent=0 // pred_fallthru
    _
  %v17 = vld [vmem:[#allocation2] sm:$0xff]
  %v18 = vld [vmem:[#allocation2 + $0x8] sm:$0xff]
  %v19 = vld [vmem:[%s0] sm:$0xff]
  %v20 = vld [vmem:[%s0 + $0x8] sm:$0xff]
  %v21 = vld [vmem:[%s1] sm:$0xff]
  %v22 = vld [vmem:[%s1 + $0x8] sm:$0xff]
  %v23 = vld [vmem:[%s1 + $0x10] sm:$0xff]
  %v24 = vld [vmem:[%s1 + $0x18] sm:$0xff]
  %v25 = vld [vmem:[%s1 + $0x20] sm:$0xff]
  %v26 = vld [vmem:[%s1 + $0x28] sm:$0xff]
  %v27 = vld [vmem:[%s1 + $0x30] sm:$0xff]
  %v28 = vld [vmem:[%s1 + $0x38] sm:$0xff]
  %v29 = vld [vmem:[%s1 + $0x40] sm:$0xff]
  %v30 = vld [vmem:[%s1 + $0x48] sm:$0xff]
  %v31 = vld [vmem:[%s1 + $0x50] sm:$0xff]
  %v32 = vld [vmem:[%s1 + $0x58] sm:$0xff]
  %v33 = vld [vmem:[%s1 + $0x60] sm:$0xff]
  %v34 = vld [vmem:[%s1 + $0x68] sm:$0xff]
  %v35 = vld [vmem:[%s1 + $0x70] sm:$0xff]
  %v36 = vld [vmem:[%s1 + $0x78] sm:$0xff]
  %37 = vmatprep.subr.mxu0 0.0
  %38 = vmatpush1.xpose.msra.mxu0 %v21
  %39 = vmatprep.subr.mxu0 0.0
  %40 = vmatpush1.xpose.msra.mxu0 %v22
  %41 = vmatprep.subr.mxu0 0.0
  %42 = vmatpush1.xpose.msra.mxu0 %v23
  %43 = vmatprep.subr.mxu0 0.0
  %44 = vmatpush1.xpose.msra.mxu0 %v24
  %45 = vmatprep.subr.mxu0 0.0
  %46 = vmatpush1.xpose.msra.mxu0 %v25
  %47 = vmatprep.subr.mxu0 0.0
  %48 = vmatpush1.xpose.msra.mxu0 %v26
  %49 = vmatprep.subr.mxu0 0.0
  %50 = vmatpush1.xpose.msra.mxu0 %v27
  %51 = vmatprep.subr.mxu0 0.0
  %52 = vmatpush1.xpose.msra.mxu0 %v28
  %53 = vmatprep.subr.mxu0 0.0
  %54 = vmatpush1.xpose.msra.mxu0 %v29
  %55 = vmatprep.subr.mxu0 0.0
  %56 = vmatpush1.xpose.msra.mxu0 %v30
  %57 = vmatprep.subr.mxu0 0.0
  %58 = vmatpush1.xpose.msra.mxu0 %v31
  %59 = vmatprep.subr.mxu0 0.0
  %60 = vmatpush1.xpose.msra.mxu0 %v32
  %61 = vmatprep.subr.mxu0 0.0
  %62 = vmatpush1.xpose.msra.mxu0 %v33
  %63 = vmatprep.subr.mxu0 0.0
  %64 = vmatpush1.xpose.msra.mxu0 %v34
  %65 = vmatprep.subr.mxu0 0.0
  %66 = vmatpush1.xpose.msra.mxu0 %v35
  %67 = vmatprep.subr.mxu0 0.0
  %68 = vmatpush1.xpose.msra.mxu0 %v36
  %69 = vmatprep.subr.mxu0 0.0
  %70 = vmatpush1.xpose.msra.mxu0 0.0
  %71 = vmatprep.subr.mxu0 0.0
  %72 = vmatpush1.xpose.msra.mxu0 0.0
  %73 = vmatprep.subr.mxu0 0.0
  %74 = vmatpush1.xpose.msra.mxu0 0.0
  %75 = vmatprep.subr.mxu0 0.0
  %76 = vmatpush1.xpose.msra.mxu0 0.0
  %77 = vmatprep.subr.mxu0 0.0
  %78 = vmatpush1.xpose.msra.mxu0 0.0
  %79 = vmatprep.subr.mxu0 0.0
  %80 = vmatpush1.xpose.msra.mxu0 0.0
  %81 = vmatprep.subr.mxu0 0.0
  %82 = vmatpush1.xpose.msra.mxu0 0.0
  %83 = vmatprep.subr.mxu0 0.0
  %84 = vmatpush1.xpose.msra.mxu0 0.0
  %85 = vmatprep.subr.mxu0 0.0
  %86 = vmatpush1.xpose.msra.mxu0 0.0
  %87 = vmatprep.subr.mxu0 0.0
  %88 = vmatpush1.xpose.msra.mxu0 0.0
  %89 = vmatprep.subr.mxu0 0.0
  %90 = vmatpush1.xpose.msra.mxu0 0.0
  %91 = vmatprep.subr.mxu0 0.0
  %92 = vmatpush1.xpose.msra.mxu0 0.0
  %93 = vmatprep.subr.mxu0 0.0
  %94 = vmatpush1.xpose.msra.mxu0 0.0
  %95 = vmatprep.subr.mxu0 0.0
  %96 = vmatpush1.xpose.msra.mxu0 0.0
  %97 = vmatprep.subr.mxu0 0.0
  %98 = vmatpush1.xpose.msra.mxu0 0.0
  %99 = vmatprep.subr.mxu0 0.0
  %100 = vmatpush1.xpose.msra.mxu0 0.0
  %101 = vmatprep.mubr.f32.mxu0 0.0
  %102 = vmatmul.mubr.f32.gmra.mrb[0].mxu0 %v19
  %v103 = vpop.f32.mrb[0].mxu0
  %v104 = vadd.f32 0.0, %v103
  %v105 = vpop.f32.mrb[0].mxu0
  %106 = vmatprep.mubr.f32.mxu0 0.0
  %107 = vmatmul.mubr.f32.gmra.mrb[0].mxu0 %v20
  %v108 = vpop.f32.mrb[0].mxu0
  %v109 = vadd.f32 0.0, %v108
  %v110 = vpop.f32.mrb[0].mxu0
  %111 = vdwg.mxu0
  %v112 = vadd.f32 %v17, %v104
  %v113 = vadd.f32 %v18, %v109
  %114 = vst [vmem:[#allocation2] sm:$0xff] %v112
  %115 = vst [vmem:[#allocation2 + $0x8] sm:$0xff] %v113
  // Predicated region
  $region14: #{feat_linear_trans.1} parent=0 // pred_check
    %p116 = pneg %p11
  $region15: #{feat_linear_trans.1} parent=0 // pred_check_branch
    %118 = sbr.rel (%p116) target = $region17
  $region16: #{feat_linear_trans.1} parent=0 // pred_region
    %v119 = vld [vmem:[#allocation2] sm:$0xff]
    %v120 = vld [vmem:[#allocation2 + $0x8] sm:$0xff]
    %121 = vst [vmem:[%s2] sm:$0xff] %v119
    %122 = vst [vmem:[%s2 + $0x8] sm:$0xff] %v120
  $region17: #{feat_linear_trans.1} parent=0 // pred_fallthru
    _
  // Predicated region
  $region18: #{feat_linear_trans.1} parent=0 // pred_check
    _
  $region19: #{feat_linear_trans.1} parent=0 // pred_check_branch
    %124 = sbr.rel (0) target = $region21
  $region20: #{feat_linear_trans.1} parent=0 // pred_region
    _
  $region21: #{feat_linear_trans.1} parent=0 // pred_fallthru
    _
  // Predicated region
  $region22: #{feat_linear_trans.1} parent=0 // pred_check
    _
  $region23: #{feat_linear_trans.1} parent=0 // pred_check_branch
    %126 = sbr.rel (0) target = $region25
  $region24: #{feat_linear_trans.1} parent=0 // pred_region
    _
  $region25: #{feat_linear_trans.1} parent=0 // pred_fallthru
    _

</llo_original>
